<compile_context>
chip_gen: v5e
topology: v5e:2x2
jax: 0.10.0
libtpu: 0.0.40
codegen_flags: <defaults>
</compile_context>

<pallas_src>
import functools
import math

import jax
import jax.numpy as jnp
from jax.experimental import pallas as pl
from jax.experimental.pallas import tpu as pltpu


# ----------------------------------------------------------------------------
# Fused MHA kernel: block_b batch elements per grid step, VMEM-resident.
# ----------------------------------------------------------------------------
def _mha_kernel(vl_ref, xq_ref, xk_ref, xv_ref,
                wq_ref, wk_ref, wv_ref, wo_ref,
                o_ref, acc_ref, *, num_heads, block_b):
    bt = pl.program_id(0)

    Bb, Tq, qdim = xq_ref.shape
    _, Tk, kdim = xk_ref.shape
    vdim = xv_ref.shape[-1]
    num_hiddens = wq_ref.shape[1]
    dh = num_hiddens // num_heads
    scale = jnp.float32(1.0 / math.sqrt(dh))

    # ---- Q/K/V projections: pack all Bb batches into tall row slabs, bf16
    # ---- MXU operands, f32 accumulation.
    xq = xq_ref[...].reshape(Bb * Tq, qdim).astype(jnp.bfloat16)
    xk = xk_ref[...].reshape(Bb * Tk, kdim).astype(jnp.bfloat16)
    xv = xv_ref[...].reshape(Bb * Tk, vdim).astype(jnp.bfloat16)

    q = jnp.dot(xq, wq_ref[...].astype(jnp.bfloat16),
                preferred_element_type=jnp.float32)          # (Bb*Tq, H)
    k = jnp.dot(xk, wk_ref[...].astype(jnp.bfloat16),
                preferred_element_type=jnp.float32)          # (Bb*Tk, H)
    v = jnp.dot(xv, wv_ref[...].astype(jnp.bfloat16),
                preferred_element_type=jnp.float32)          # (Bb*Tk, H)

    col = jax.lax.broadcasted_iota(jnp.int32, (Tq, Tk), 1)
    masked_value = jnp.float32(-1000000.0)   # same fill as d2l's sequence_mask

    # Per (batch, head) masked-softmax attention; each head's output is written
    # straight into the VMEM scratch slab (bounds live ranges, no concatenate).
    for b in range(Bb):                       # static, block_b capped in wrapper
        vl = vl_ref[bt * block_b + b]         # scalar valid length (SMEM read)
        qrows = slice(b * Tq, (b + 1) * Tq)
        krows = slice(b * Tk, (b + 1) * Tk)
        for h in range(num_heads):            # static, num_heads small
            cols = slice(h * dh, (h + 1) * dh)
            # Scale q (Tq*dh elements) instead of the (Tq, Tk) score matrix.
            qh = (q[qrows, cols] * scale).astype(jnp.bfloat16)
            kh = k[krows, cols].astype(jnp.bfloat16)
            vh = v[krows, cols].astype(jnp.bfloat16)
            # Contract last dims directly; no materialized kh.T.
            scores = jax.lax.dot_general(
                qh, kh, (((1,), (1,)), ((), ())),
                preferred_element_type=jnp.float32)          # (Tq, Tk), f32
            scores = jnp.where(col < vl, scores, masked_value)
            m = jnp.max(scores, axis=-1, keepdims=True)
            e = jnp.exp(scores - m)
            denom = jnp.sum(e, axis=-1, keepdims=True)
            w = e * pl.reciprocal(denom, approx=True)        # EUP vrcp slot
            # TODO(synk): dropout on attention weights is a no-op (eval mode).
            acc_ref[qrows, cols] = jnp.dot(
                w.astype(jnp.bfloat16), vh,
                preferred_element_type=jnp.float32)          # (Tq, dh)

    # Output projection on the full lane-dense (Bb*Tq, H) slab.
    out = jnp.dot(acc_ref[...].astype(jnp.bfloat16),
                  wo_ref[...].astype(jnp.bfloat16),
                  preferred_element_type=jnp.float32)        # (Bb*Tq, H)
    o_ref[...] = out.reshape(Bb, Tq, num_hiddens).astype(o_ref.dtype)


def _pick_block_b(batch, seq_q, *, max_rows=256, max_bb=8):
    """Largest divisor of `batch` keeping row count modest and unroll bounded."""
    cap = max(1, min(max_bb, max_rows // max(seq_q, 1)))
    best = 1
    for d in range(1, batch + 1):
        if batch % d == 0 and d <= cap:
            best = d
    return best


def multi_head_attention(queries, keys, values, valid_lens, params, num_heads):
    """Fused Pallas forward pass of d2l MultiHeadAttention (eval mode)."""
    Wq, Wk, Wv, Wo = params               # each (in_features, num_hiddens)
    B, Tq, qdim = queries.shape
    _, Tk, kdim = keys.shape
    _, _, vdim = values.shape
    num_hiddens = Wq.shape[1]
    assert num_hiddens % num_heads == 0

    if valid_lens is None:
        vl = jnp.full((B,), Tk, dtype=jnp.int32)
    else:
        # TODO(synk): 2-D (per-query) valid_lens of the d2l module is not
        # supported here; only the 1-D per-batch form is handled.
        assert valid_lens.ndim == 1
        vl = valid_lens.astype(jnp.int32)

    block_b = _pick_block_b(B, Tq)
    grid = (B // block_b,)

    kernel = functools.partial(_mha_kernel, num_heads=num_heads, block_b=block_b)

    # Rough per-step VMEM requirement (double-buffered in/out, weights,
    # scratch, f32 working set) -> scoped VMEM limit with headroom.
    f32 = 4
    in_bytes = block_b * (Tq * qdim + Tk * kdim + Tk * vdim) * f32
    w_bytes = (qdim + kdim + vdim + num_hiddens) * num_hiddens * f32
    out_bytes = block_b * Tq * num_hiddens * f32
    work_bytes = block_b * (Tq + 2 * Tk) * num_hiddens * f32 + Tq * Tk * f32 * 2
    vmem_est = 2 * (in_bytes + out_bytes + w_bytes) + out_bytes + work_bytes
    vmem_limit = int(min(max(4 * vmem_est, 32 * 1024 * 1024), 64 * 1024 * 1024))

    cost = pl.CostEstimate(
        flops=int(2 * B * (Tq * qdim + Tk * kdim + Tk * vdim) * num_hiddens
                  + 4 * B * Tq * Tk * num_hiddens
                  + 2 * B * Tq * num_hiddens * num_hiddens),
        transcendentals=int(B * num_heads * Tq * Tk),
        bytes_accessed=int(f32 * (B * (Tq * qdim + Tk * kdim + Tk * vdim)
                                  + (qdim + kdim + vdim + num_hiddens) * num_hiddens
                                  + B * Tq * num_hiddens)),
    )

    return pl.pallas_call(
        kernel,
        out_shape=jax.ShapeDtypeStruct((B, Tq, num_hiddens), queries.dtype),
        grid_spec=pltpu.PrefetchScalarGridSpec(
            num_scalar_prefetch=1,
            grid=grid,
            in_specs=[
                pl.BlockSpec((block_b, Tq, qdim), lambda b, vl: (b, 0, 0)),
                pl.BlockSpec((block_b, Tk, kdim), lambda b, vl: (b, 0, 0)),
                pl.BlockSpec((block_b, Tk, vdim), lambda b, vl: (b, 0, 0)),
                pl.BlockSpec((qdim, num_hiddens), lambda b, vl: (0, 0)),
                pl.BlockSpec((kdim, num_hiddens), lambda b, vl: (0, 0)),
                pl.BlockSpec((vdim, num_hiddens), lambda b, vl: (0, 0)),
                pl.BlockSpec((num_hiddens, num_hiddens), lambda b, vl: (0, 0)),
            ],
            out_specs=pl.BlockSpec((block_b, Tq, num_hiddens),
                                   lambda b, vl: (b, 0, 0)),
            scratch_shapes=[pltpu.VMEM((block_b * Tq, num_hiddens), jnp.float32)],
        ),
        compiler_params=pltpu.CompilerParams(
            dimension_semantics=("parallel",),   # batch-tile axis -> 2-TC split
            vmem_limit_bytes=vmem_limit,
        ),
        cost_estimate=cost,
    )(vl, queries, keys, values, Wq, Wk, Wv, Wo)


# ----------------------------------------------------------------------------
# Pure-JAX reference (mirrors the PyTorch math) for a correctness check.
# ----------------------------------------------------------------------------
def _transpose_qkv(x, num_heads):
    B, T, nh = x.shape
    x = x.reshape(B, T, num_heads, nh // num_heads).transpose(0, 2, 1, 3)
    return x.reshape(B * num_heads, T, nh // num_heads)


def _transpose_output(x, num_heads):
    BH, T, dh = x.shape
    x = x.reshape(BH // num_heads, num_heads, T, dh).transpose(0, 2, 1, 3)
    return x.reshape(BH // num_heads, T, num_heads * dh)


def reference_mha(queries, keys, values, valid_lens, params, num_heads):
    Wq, Wk, Wv, Wo = params
    q = _transpose_qkv(queries @ Wq, num_heads)
    k = _transpose_qkv(keys @ Wk, num_heads)
    v = _transpose_qkv(values @ Wv, num_heads)
    d = q.shape[-1]
    scores = jnp.einsum("bqd,bkd->bqk", q, k) / math.sqrt(d)
    if valid_lens is not None:
        vl = jnp.repeat(valid_lens.astype(jnp.int32), num_heads, axis=0)
        col = jnp.arange(scores.shape[-1])[None, None, :]
        scores = jnp.where(col < vl[:, None, None], scores, -1000000.0)
    w = jax.nn.softmax(scores, axis=-1)
    out = jnp.einsum("bqk,bkd->bqd", w, v)
    return _transpose_output(out, num_heads) @ Wo


if __name__ == "__main__":
    key = jax.random.PRNGKey(0)
    # Module hyperparameters (small, consistent with the forward signature).
    key_size, query_size, value_size = 20, 24, 28
    num_hiddens, num_heads = 32, 4
    B, Tq, Tk = 2, 8, 10

    ks = jax.random.split(key, 8)
    queries = jax.random.normal(ks[0], (B, Tq, query_size), jnp.float32)
    keys_in = jax.random.normal(ks[1], (B, Tk, key_size), jnp.float32)
    values_in = jax.random.normal(ks[2], (B, Tk, value_size), jnp.float32)
    valid_lens = jnp.array([3, 7], dtype=jnp.int32)

    # Deterministic parameter init (nn.Linear weights stored as (in, out)).
    def init_w(k, fan_in, fan_out):
        bound = 1.0 / math.sqrt(fan_in)
        return jax.random.uniform(k, (fan_in, fan_out), jnp.float32, -bound, bound)

    Wq = init_w(ks[3], query_size, num_hiddens)
    Wk = init_w(ks[4], key_size, num_hiddens)
    Wv = init_w(ks[5], value_size, num_hiddens)
    Wo = init_w(ks[6], num_hiddens, num_hiddens)
    params = (Wq, Wk, Wv, Wo)

    out = multi_head_attention(queries, keys_in, values_in, valid_lens, params, num_heads)
    out = jax.block_until_ready(out)

    ref = reference_mha(queries, keys_in, values_in, valid_lens, params, num_heads)
    assert out.shape == (B, Tq, num_hiddens)
    # Tolerance relaxed for bf16 MXU operands (f32 accumulation) and the EUP
    # approximate reciprocal used for the softmax normalization.
    assert jnp.allclose(out, ref, atol=3e-2, rtol=3e-2), "mismatch vs reference"

    print("KERNEL_OK")
</pallas_src>

<mosaic_0001>
module attributes {stable_mosaic.version = 11 : i64} {
  func.func @_mha_kernel(%arg0: i32, %arg1: memref<2xi32, #tpu.memory_space<smem>>, %arg2: memref<2x8x24xf32, #tpu.memory_space<vmem>>, %arg3: memref<2x10x20xf32, #tpu.memory_space<vmem>>, %arg4: memref<2x10x28xf32, #tpu.memory_space<vmem>>, %arg5: memref<24x32xf32, #tpu.memory_space<vmem>>, %arg6: memref<20x32xf32, #tpu.memory_space<vmem>>, %arg7: memref<28x32xf32, #tpu.memory_space<vmem>>, %arg8: memref<32x32xf32, #tpu.memory_space<vmem>>, %arg9: memref<2x8x32xf32, #tpu.memory_space<vmem>>, %arg10: memref<16x32xf32, #tpu.memory_space<vmem>>) attributes {dimension_semantics = [#tpu.dimension_semantics<parallel>], iteration_bounds = array<i64: 1>, scalar_prefetch = 1 : i64, scratch_operands = 1 : i64, tpu.core_type = #tpu.core_type<tc>, window_params = [{transform_indices = @transform_0, window_bounds = array<i64: 2, 8, 24>}, {transform_indices = @transform_1, window_bounds = array<i64: 2, 10, 20>}, {transform_indices = @transform_2, window_bounds = array<i64: 2, 10, 28>}, {pipeline_mode = #tpu.pipeline_mode<synchronous>, transform_indices = @transform_3, window_bounds = array<i64: 24, 32>}, {pipeline_mode = #tpu.pipeline_mode<synchronous>, transform_indices = @transform_4, window_bounds = array<i64: 20, 32>}, {pipeline_mode = #tpu.pipeline_mode<synchronous>, transform_indices = @transform_5, window_bounds = array<i64: 28, 32>}, {pipeline_mode = #tpu.pipeline_mode<synchronous>, transform_indices = @transform_6, window_bounds = array<i64: 32, 32>}, {transform_indices = @transform_7, window_bounds = array<i64: 2, 8, 32>}]} {
    %c0 = arith.constant 0 : index
    %c0_0 = arith.constant 0 : index
    %c0_1 = arith.constant 0 : index
    %0 = vector.load %arg2[%c0, %c0_0, %c0_1] : memref<2x8x24xf32, #tpu.memory_space<vmem>>, vector<2x8x24xf32>
    %1 = vector.shape_cast %0 : vector<2x8x24xf32> to vector<16x24xf32>
    %2 = arith.truncf %1 : vector<16x24xf32> to vector<16x24xbf16>
    %c0_2 = arith.constant 0 : index
    %c0_3 = arith.constant 0 : index
    %c0_4 = arith.constant 0 : index
    %3 = vector.load %arg3[%c0_2, %c0_3, %c0_4] : memref<2x10x20xf32, #tpu.memory_space<vmem>>, vector<2x10x20xf32>
    %4 = vector.shape_cast %3 : vector<2x10x20xf32> to vector<20x20xf32>
    %5 = arith.truncf %4 : vector<20x20xf32> to vector<20x20xbf16>
    %c0_5 = arith.constant 0 : index
    %c0_6 = arith.constant 0 : index
    %c0_7 = arith.constant 0 : index
    %6 = vector.load %arg4[%c0_5, %c0_6, %c0_7] : memref<2x10x28xf32, #tpu.memory_space<vmem>>, vector<2x10x28xf32>
    %7 = vector.shape_cast %6 : vector<2x10x28xf32> to vector<20x28xf32>
    %8 = arith.truncf %7 : vector<20x28xf32> to vector<20x28xbf16>
    %c0_8 = arith.constant 0 : index
    %c0_9 = arith.constant 0 : index
    %9 = vector.load %arg5[%c0_8, %c0_9] : memref<24x32xf32, #tpu.memory_space<vmem>>, vector<24x32xf32>
    %10 = arith.truncf %9 : vector<24x32xf32> to vector<24x32xbf16>
    %cst = arith.constant dense<0.000000e+00> : vector<16x32xf32>
    %11 = tpu.matmul %2, %10, %cst {dimension_numbers = #tpu.dot_dimension_numbers<[1], [0], [0], [1], [0, 0, 1, 1], [], []>} : vector<16x24xbf16>, vector<24x32xbf16>, vector<16x32xf32> -> vector<16x32xf32>
    %c0_10 = arith.constant 0 : index
    %c0_11 = arith.constant 0 : index
    %12 = vector.load %arg6[%c0_10, %c0_11] : memref<20x32xf32, #tpu.memory_space<vmem>>, vector<20x32xf32>
    %13 = arith.truncf %12 : vector<20x32xf32> to vector<20x32xbf16>
    %cst_12 = arith.constant dense<0.000000e+00> : vector<20x32xf32>
    %14 = tpu.matmul %5, %13, %cst_12 {dimension_numbers = #tpu.dot_dimension_numbers<[1], [0], [0], [1], [0, 0, 1, 1], [], []>} : vector<20x20xbf16>, vector<20x32xbf16>, vector<20x32xf32> -> vector<20x32xf32>
    %c0_13 = arith.constant 0 : index
    %c0_14 = arith.constant 0 : index
    %15 = vector.load %arg7[%c0_13, %c0_14] : memref<28x32xf32, #tpu.memory_space<vmem>>, vector<28x32xf32>
    %16 = arith.truncf %15 : vector<28x32xf32> to vector<28x32xbf16>
    %cst_15 = arith.constant dense<0.000000e+00> : vector<20x32xf32>
    %17 = tpu.matmul %8, %16, %cst_15 {dimension_numbers = #tpu.dot_dimension_numbers<[1], [0], [0], [1], [0, 0, 1, 1], [], []>} : vector<20x28xbf16>, vector<28x32xbf16>, vector<20x32xf32> -> vector<20x32xf32>
    %18 = tpu.iota {dimensions = array<i32: 1>} : vector<8x10xi32>
    %c2_i32 = arith.constant 2 : i32
    %19 = arith.muli %arg0, %c2_i32 : i32
    %c0_i32 = arith.constant 0 : i32
    %20 = arith.addi %19, %c0_i32 : i32
    %21 = arith.index_cast %20 : i32 to index
    %22 = memref.load %arg1[%21] : memref<2xi32, #tpu.memory_space<smem>>
    %23 = vector.extract_strided_slice %11 {offsets = [0, 0], sizes = [8, 8], strides = [1, 1]} : vector<16x32xf32> to vector<8x8xf32>
    %cst_16 = arith.constant 0.353553385 : f32
    %24 = vector.broadcast %cst_16 : f32 to vector<8x8xf32>
    %25 = arith.mulf %23, %24 : vector<8x8xf32>
    %26 = arith.truncf %25 : vector<8x8xf32> to vector<8x8xbf16>
    %27 = vector.extract_strided_slice %14 {offsets = [0, 0], sizes = [10, 8], strides = [1, 1]} : vector<20x32xf32> to vector<10x8xf32>
    %28 = arith.truncf %27 : vector<10x8xf32> to vector<10x8xbf16>
    %29 = vector.extract_strided_slice %17 {offsets = [0, 0], sizes = [10, 8], strides = [1, 1]} : vector<20x32xf32> to vector<10x8xf32>
    %30 = arith.truncf %29 : vector<10x8xf32> to vector<10x8xbf16>
    %cst_17 = arith.constant dense<0.000000e+00> : vector<8x10xf32>
    %31 = tpu.matmul %26, %28, %cst_17 {dimension_numbers = #tpu.dot_dimension_numbers<[1], [1], [0], [0], [0, 0, 1, 0], [], []>} : vector<8x8xbf16>, vector<10x8xbf16>, vector<8x10xf32> -> vector<8x10xf32>
    %32 = vector.broadcast %22 : i32 to vector<8x10xi32>
    %33 = arith.cmpi slt, %18, %32 : vector<8x10xi32>
    %cst_18 = arith.constant -1.000000e+06 : f32
    %34 = vector.broadcast %cst_18 : f32 to vector<8x10xf32>
    %35 = arith.select %33, %31, %34 : vector<8x10xi1>, vector<8x10xf32>
    %cst_19 = arith.constant dense<0xFF800000> : vector<8xf32>
    %36 = vector.multi_reduction <maximumf>, %35, %cst_19 [1] : vector<8x10xf32> to vector<8xf32>
    %37 = vector.shape_cast %36 : vector<8xf32> to vector<8x1xf32>
    %38 = vector.broadcast %37 : vector<8x1xf32> to vector<8x10xf32>
    %39 = arith.subf %35, %38 : vector<8x10xf32>
    %40 = math.exp %39 : vector<8x10xf32>
    %cst_20 = arith.constant dense<0.000000e+00> : vector<8xf32>
    %41 = vector.multi_reduction <add>, %40, %cst_20 [1] : vector<8x10xf32> to vector<8xf32>
    %42 = vector.shape_cast %41 : vector<8xf32> to vector<8x1xf32>
    %43 = tpu.reciprocal %42 {approx = true} : vector<8x1xf32> -> vector<8x1xf32>
    %44 = vector.broadcast %43 : vector<8x1xf32> to vector<8x10xf32>
    %45 = arith.mulf %40, %44 : vector<8x10xf32>
    %46 = arith.truncf %45 : vector<8x10xf32> to vector<8x10xbf16>
    %cst_21 = arith.constant dense<0.000000e+00> : vector<8x8xf32>
    %47 = tpu.matmul %46, %30, %cst_21 {dimension_numbers = #tpu.dot_dimension_numbers<[1], [0], [0], [1], [0, 0, 1, 1], [], []>} : vector<8x10xbf16>, vector<10x8xbf16>, vector<8x8xf32> -> vector<8x8xf32>
    %c0_22 = arith.constant 0 : index
    %c0_23 = arith.constant 0 : index
    %48 = vector.load %arg10[%c0_22, %c0_23] : memref<16x32xf32, #tpu.memory_space<vmem>>, vector<8x8xf32>
    tpu.vector_store %arg10[%c0_22, %c0_23], %47 {strides = array<i32>} : memref<16x32xf32, #tpu.memory_space<vmem>>, vector<8x8xf32>,
    %49 = vector.extract_strided_slice %11 {offsets = [0, 8], sizes = [8, 8], strides = [1, 1]} : vector<16x32xf32> to vector<8x8xf32>
    %cst_24 = arith.constant 0.353553385 : f32
    %50 = vector.broadcast %cst_24 : f32 to vector<8x8xf32>
    %51 = arith.mulf %49, %50 : vector<8x8xf32>
    %52 = arith.truncf %51 : vector<8x8xf32> to vector<8x8xbf16>
    %53 = vector.extract_strided_slice %14 {offsets = [0, 8], sizes = [10, 8], strides = [1, 1]} : vector<20x32xf32> to vector<10x8xf32>
    %54 = arith.truncf %53 : vector<10x8xf32> to vector<10x8xbf16>
    %55 = vector.extract_strided_slice %17 {offsets = [0, 8], sizes = [10, 8], strides = [1, 1]} : vector<20x32xf32> to vector<10x8xf32>
    %56 = arith.truncf %55 : vector<10x8xf32> to vector<10x8xbf16>
    %cst_25 = arith.constant dense<0.000000e+00> : vector<8x10xf32>
    %57 = tpu.matmul %52, %54, %cst_25 {dimension_numbers = #tpu.dot_dimension_numbers<[1], [1], [0], [0], [0, 0, 1, 0], [], []>} : vector<8x8xbf16>, vector<10x8xbf16>, vector<8x10xf32> -> vector<8x10xf32>
    %58 = vector.broadcast %22 : i32 to vector<8x10xi32>
    %59 = arith.cmpi slt, %18, %58 : vector<8x10xi32>
    %cst_26 = arith.constant -1.000000e+06 : f32
    %60 = vector.broadcast %cst_26 : f32 to vector<8x10xf32>
    %61 = arith.select %59, %57, %60 : vector<8x10xi1>, vector<8x10xf32>
    %cst_27 = arith.constant dense<0xFF800000> : vector<8xf32>
    %62 = vector.multi_reduction <maximumf>, %61, %cst_27 [1] : vector<8x10xf32> to vector<8xf32>
    %63 = vector.shape_cast %62 : vector<8xf32> to vector<8x1xf32>
    %64 = vector.broadcast %63 : vector<8x1xf32> to vector<8x10xf32>
    %65 = arith.subf %61, %64 : vector<8x10xf32>
    %66 = math.exp %65 : vector<8x10xf32>
    %cst_28 = arith.constant dense<0.000000e+00> : vector<8xf32>
    %67 = vector.multi_reduction <add>, %66, %cst_28 [1] : vector<8x10xf32> to vector<8xf32>
    %68 = vector.shape_cast %67 : vector<8xf32> to vector<8x1xf32>
    %69 = tpu.reciprocal %68 {approx = true} : vector<8x1xf32> -> vector<8x1xf32>
    %70 = vector.broadcast %69 : vector<8x1xf32> to vector<8x10xf32>
    %71 = arith.mulf %66, %70 : vector<8x10xf32>
    %72 = arith.truncf %71 : vector<8x10xf32> to vector<8x10xbf16>
    %cst_29 = arith.constant dense<0.000000e+00> : vector<8x8xf32>
    %73 = tpu.matmul %72, %56, %cst_29 {dimension_numbers = #tpu.dot_dimension_numbers<[1], [0], [0], [1], [0, 0, 1, 1], [], []>} : vector<8x10xbf16>, vector<10x8xbf16>, vector<8x8xf32> -> vector<8x8xf32>
    %c0_30 = arith.constant 0 : index
    %c8 = arith.constant 8 : index
    %74 = vector.load %arg10[%c0_30, %c8] : memref<16x32xf32, #tpu.memory_space<vmem>>, vector<8x8xf32>
    tpu.vector_store %arg10[%c0_30, %c8], %73 {strides = array<i32>} : memref<16x32xf32, #tpu.memory_space<vmem>>, vector<8x8xf32>,
    %75 = vector.extract_strided_slice %11 {offsets = [0, 16], sizes = [8, 8], strides = [1, 1]} : vector<16x32xf32> to vector<8x8xf32>
    %cst_31 = arith.constant 0.353553385 : f32
    %76 = vector.broadcast %cst_31 : f32 to vector<8x8xf32>
    %77 = arith.mulf %75, %76 : vector<8x8xf32>
    %78 = arith.truncf %77 : vector<8x8xf32> to vector<8x8xbf16>
    %79 = vector.extract_strided_slice %14 {offsets = [0, 16], sizes = [10, 8], strides = [1, 1]} : vector<20x32xf32> to vector<10x8xf32>
    %80 = arith.truncf %79 : vector<10x8xf32> to vector<10x8xbf16>
    %81 = vector.extract_strided_slice %17 {offsets = [0, 16], sizes = [10, 8], strides = [1, 1]} : vector<20x32xf32> to vector<10x8xf32>
    %82 = arith.truncf %81 : vector<10x8xf32> to vector<10x8xbf16>
    %cst_32 = arith.constant dense<0.000000e+00> : vector<8x10xf32>
    %83 = tpu.matmul %78, %80, %cst_32 {dimension_numbers = #tpu.dot_dimension_numbers<[1], [1], [0], [0], [0, 0, 1, 0], [], []>} : vector<8x8xbf16>, vector<10x8xbf16>, vector<8x10xf32> -> vector<8x10xf32>
    %84 = vector.broadcast %22 : i32 to vector<8x10xi32>
    %85 = arith.cmpi slt, %18, %84 : vector<8x10xi32>
    %cst_33 = arith.constant -1.000000e+06 : f32
    %86 = vector.broadcast %cst_33 : f32 to vector<8x10xf32>
    %87 = arith.select %85, %83, %86 : vector<8x10xi1>, vector<8x10xf32>
    %cst_34 = arith.constant dense<0xFF800000> : vector<8xf32>
    %88 = vector.multi_reduction <maximumf>, %87, %cst_34 [1] : vector<8x10xf32> to vector<8xf32>
    %89 = vector.shape_cast %88 : vector<8xf32> to vector<8x1xf32>
    %90 = vector.broadcast %89 : vector<8x1xf32> to vector<8x10xf32>
    %91 = arith.subf %87, %90 : vector<8x10xf32>
    %92 = math.exp %91 : vector<8x10xf32>
    %cst_35 = arith.constant dense<0.000000e+00> : vector<8xf32>
    %93 = vector.multi_reduction <add>, %92, %cst_35 [1] : vector<8x10xf32> to vector<8xf32>
    %94 = vector.shape_cast %93 : vector<8xf32> to vector<8x1xf32>
    %95 = tpu.reciprocal %94 {approx = true} : vector<8x1xf32> -> vector<8x1xf32>
    %96 = vector.broadcast %95 : vector<8x1xf32> to vector<8x10xf32>
    %97 = arith.mulf %92, %96 : vector<8x10xf32>
    %98 = arith.truncf %97 : vector<8x10xf32> to vector<8x10xbf16>
    %cst_36 = arith.constant dense<0.000000e+00> : vector<8x8xf32>
    %99 = tpu.matmul %98, %82, %cst_36 {dimension_numbers = #tpu.dot_dimension_numbers<[1], [0], [0], [1], [0, 0, 1, 1], [], []>} : vector<8x10xbf16>, vector<10x8xbf16>, vector<8x8xf32> -> vector<8x8xf32>
    %c0_37 = arith.constant 0 : index
    %c16 = arith.constant 16 : index
    %100 = vector.load %arg10[%c0_37, %c16] : memref<16x32xf32, #tpu.memory_space<vmem>>, vector<8x8xf32>
    tpu.vector_store %arg10[%c0_37, %c16], %99 {strides = array<i32>} : memref<16x32xf32, #tpu.memory_space<vmem>>, vector<8x8xf32>,
    %101 = vector.extract_strided_slice %11 {offsets = [0, 24], sizes = [8, 8], strides = [1, 1]} : vector<16x32xf32> to vector<8x8xf32>
    %cst_38 = arith.constant 0.353553385 : f32
    %102 = vector.broadcast %cst_38 : f32 to vector<8x8xf32>
    %103 = arith.mulf %101, %102 : vector<8x8xf32>
    %104 = arith.truncf %103 : vector<8x8xf32> to vector<8x8xbf16>
    %105 = vector.extract_strided_slice %14 {offsets = [0, 24], sizes = [10, 8], strides = [1, 1]} : vector<20x32xf32> to vector<10x8xf32>
    %106 = arith.truncf %105 : vector<10x8xf32> to vector<10x8xbf16>
    %107 = vector.extract_strided_slice %17 {offsets = [0, 24], sizes = [10, 8], strides = [1, 1]} : vector<20x32xf32> to vector<10x8xf32>
    %108 = arith.truncf %107 : vector<10x8xf32> to vector<10x8xbf16>
    %cst_39 = arith.constant dense<0.000000e+00> : vector<8x10xf32>
    %109 = tpu.matmul %104, %106, %cst_39 {dimension_numbers = #tpu.dot_dimension_numbers<[1], [1], [0], [0], [0, 0, 1, 0], [], []>} : vector<8x8xbf16>, vector<10x8xbf16>, vector<8x10xf32> -> vector<8x10xf32>
    %110 = vector.broadcast %22 : i32 to vector<8x10xi32>
    %111 = arith.cmpi slt, %18, %110 : vector<8x10xi32>
    %cst_40 = arith.constant -1.000000e+06 : f32
    %112 = vector.broadcast %cst_40 : f32 to vector<8x10xf32>
    %113 = arith.select %111, %109, %112 : vector<8x10xi1>, vector<8x10xf32>
    %cst_41 = arith.constant dense<0xFF800000> : vector<8xf32>
    %114 = vector.multi_reduction <maximumf>, %113, %cst_41 [1] : vector<8x10xf32> to vector<8xf32>
    %115 = vector.shape_cast %114 : vector<8xf32> to vector<8x1xf32>
    %116 = vector.broadcast %115 : vector<8x1xf32> to vector<8x10xf32>
    %117 = arith.subf %113, %116 : vector<8x10xf32>
    %118 = math.exp %117 : vector<8x10xf32>
    %cst_42 = arith.constant dense<0.000000e+00> : vector<8xf32>
    %119 = vector.multi_reduction <add>, %118, %cst_42 [1] : vector<8x10xf32> to vector<8xf32>
    %120 = vector.shape_cast %119 : vector<8xf32> to vector<8x1xf32>
    %121 = tpu.reciprocal %120 {approx = true} : vector<8x1xf32> -> vector<8x1xf32>
    %122 = vector.broadcast %121 : vector<8x1xf32> to vector<8x10xf32>
    %123 = arith.mulf %118, %122 : vector<8x10xf32>
    %124 = arith.truncf %123 : vector<8x10xf32> to vector<8x10xbf16>
    %cst_43 = arith.constant dense<0.000000e+00> : vector<8x8xf32>
    %125 = tpu.matmul %124, %108, %cst_43 {dimension_numbers = #tpu.dot_dimension_numbers<[1], [0], [0], [1], [0, 0, 1, 1], [], []>} : vector<8x10xbf16>, vector<10x8xbf16>, vector<8x8xf32> -> vector<8x8xf32>
    %c0_44 = arith.constant 0 : index
    %c24 = arith.constant 24 : index
    %126 = vector.load %arg10[%c0_44, %c24] : memref<16x32xf32, #tpu.memory_space<vmem>>, vector<8x8xf32>
    tpu.vector_store %arg10[%c0_44, %c24], %125 {strides = array<i32>} : memref<16x32xf32, #tpu.memory_space<vmem>>, vector<8x8xf32>,
    %c2_i32_45 = arith.constant 2 : i32
    %127 = arith.muli %arg0, %c2_i32_45 : i32
    %c1_i32 = arith.constant 1 : i32
    %128 = arith.addi %127, %c1_i32 : i32
    %129 = arith.index_cast %128 : i32 to index
    %130 = memref.load %arg1[%129] : memref<2xi32, #tpu.memory_space<smem>>
    %131 = vector.extract_strided_slice %11 {offsets = [8, 0], sizes = [8, 8], strides = [1, 1]} : vector<16x32xf32> to vector<8x8xf32>
    %cst_46 = arith.constant 0.353553385 : f32
    %132 = vector.broadcast %cst_46 : f32 to vector<8x8xf32>
    %133 = arith.mulf %131, %132 : vector<8x8xf32>
    %134 = arith.truncf %133 : vector<8x8xf32> to vector<8x8xbf16>
    %135 = vector.extract_strided_slice %14 {offsets = [10, 0], sizes = [10, 8], strides = [1, 1]} : vector<20x32xf32> to vector<10x8xf32>
    %136 = arith.truncf %135 : vector<10x8xf32> to vector<10x8xbf16>
    %137 = vector.extract_strided_slice %17 {offsets = [10, 0], sizes = [10, 8], strides = [1, 1]} : vector<20x32xf32> to vector<10x8xf32>
    %138 = arith.truncf %137 : vector<10x8xf32> to vector<10x8xbf16>
    %cst_47 = arith.constant dense<0.000000e+00> : vector<8x10xf32>
    %139 = tpu.matmul %134, %136, %cst_47 {dimension_numbers = #tpu.dot_dimension_numbers<[1], [1], [0], [0], [0, 0, 1, 0], [], []>} : vector<8x8xbf16>, vector<10x8xbf16>, vector<8x10xf32> -> vector<8x10xf32>
    %140 = vector.broadcast %130 : i32 to vector<8x10xi32>
    %141 = arith.cmpi slt, %18, %140 : vector<8x10xi32>
    %cst_48 = arith.constant -1.000000e+06 : f32
    %142 = vector.broadcast %cst_48 : f32 to vector<8x10xf32>
    %143 = arith.select %141, %139, %142 : vector<8x10xi1>, vector<8x10xf32>
    %cst_49 = arith.constant dense<0xFF800000> : vector<8xf32>
    %144 = vector.multi_reduction <maximumf>, %143, %cst_49 [1] : vector<8x10xf32> to vector<8xf32>
    %145 = vector.shape_cast %144 : vector<8xf32> to vector<8x1xf32>
    %146 = vector.broadcast %145 : vector<8x1xf32> to vector<8x10xf32>
    %147 = arith.subf %143, %146 : vector<8x10xf32>
    %148 = math.exp %147 : vector<8x10xf32>
    %cst_50 = arith.constant dense<0.000000e+00> : vector<8xf32>
    %149 = vector.multi_reduction <add>, %148, %cst_50 [1] : vector<8x10xf32> to vector<8xf32>
    %150 = vector.shape_cast %149 : vector<8xf32> to vector<8x1xf32>
    %151 = tpu.reciprocal %150 {approx = true} : vector<8x1xf32> -> vector<8x1xf32>
    %152 = vector.broadcast %151 : vector<8x1xf32> to vector<8x10xf32>
    %153 = arith.mulf %148, %152 : vector<8x10xf32>
    %154 = arith.truncf %153 : vector<8x10xf32> to vector<8x10xbf16>
    %cst_51 = arith.constant dense<0.000000e+00> : vector<8x8xf32>
    %155 = tpu.matmul %154, %138, %cst_51 {dimension_numbers = #tpu.dot_dimension_numbers<[1], [0], [0], [1], [0, 0, 1, 1], [], []>} : vector<8x10xbf16>, vector<10x8xbf16>, vector<8x8xf32> -> vector<8x8xf32>
    %c8_52 = arith.constant 8 : index
    %c0_53 = arith.constant 0 : index
    %156 = vector.load %arg10[%c8_52, %c0_53] : memref<16x32xf32, #tpu.memory_space<vmem>>, vector<8x8xf32>
    tpu.vector_store %arg10[%c8_52, %c0_53], %155 {strides = array<i32>} : memref<16x32xf32, #tpu.memory_space<vmem>>, vector<8x8xf32>,
    %157 = vector.extract_strided_slice %11 {offsets = [8, 8], sizes = [8, 8], strides = [1, 1]} : vector<16x32xf32> to vector<8x8xf32>
    %cst_54 = arith.constant 0.353553385 : f32
    %158 = vector.broadcast %cst_54 : f32 to vector<8x8xf32>
    %159 = arith.mulf %157, %158 : vector<8x8xf32>
    %160 = arith.truncf %159 : vector<8x8xf32> to vector<8x8xbf16>
    %161 = vector.extract_strided_slice %14 {offsets = [10, 8], sizes = [10, 8], strides = [1, 1]} : vector<20x32xf32> to vector<10x8xf32>
    %162 = arith.truncf %161 : vector<10x8xf32> to vector<10x8xbf16>
    %163 = vector.extract_strided_slice %17 {offsets = [10, 8], sizes = [10, 8], strides = [1, 1]} : vector<20x32xf32> to vector<10x8xf32>
    %164 = arith.truncf %163 : vector<10x8xf32> to vector<10x8xbf16>
    %cst_55 = arith.constant dense<0.000000e+00> : vector<8x10xf32>
    %165 = tpu.matmul %160, %162, %cst_55 {dimension_numbers = #tpu.dot_dimension_numbers<[1], [1], [0], [0], [0, 0, 1, 0], [], []>} : vector<8x8xbf16>, vector<10x8xbf16>, vector<8x10xf32> -> vector<8x10xf32>
    %166 = vector.broadcast %130 : i32 to vector<8x10xi32>
    %167 = arith.cmpi slt, %18, %166 : vector<8x10xi32>
    %cst_56 = arith.constant -1.000000e+06 : f32
    %168 = vector.broadcast %cst_56 : f32 to vector<8x10xf32>
    %169 = arith.select %167, %165, %168 : vector<8x10xi1>, vector<8x10xf32>
    %cst_57 = arith.constant dense<0xFF800000> : vector<8xf32>
    %170 = vector.multi_reduction <maximumf>, %169, %cst_57 [1] : vector<8x10xf32> to vector<8xf32>
    %171 = vector.shape_cast %170 : vector<8xf32> to vector<8x1xf32>
    %172 = vector.broadcast %171 : vector<8x1xf32> to vector<8x10xf32>
    %173 = arith.subf %169, %172 : vector<8x10xf32>
    %174 = math.exp %173 : vector<8x10xf32>
    %cst_58 = arith.constant dense<0.000000e+00> : vector<8xf32>
    %175 = vector.multi_reduction <add>, %174, %cst_58 [1] : vector<8x10xf32> to vector<8xf32>
    %176 = vector.shape_cast %175 : vector<8xf32> to vector<8x1xf32>
    %177 = tpu.reciprocal %176 {approx = true} : vector<8x1xf32> -> vector<8x1xf32>
    %178 = vector.broadcast %177 : vector<8x1xf32> to vector<8x10xf32>
    %179 = arith.mulf %174, %178 : vector<8x10xf32>
    %180 = arith.truncf %179 : vector<8x10xf32> to vector<8x10xbf16>
    %cst_59 = arith.constant dense<0.000000e+00> : vector<8x8xf32>
    %181 = tpu.matmul %180, %164, %cst_59 {dimension_numbers = #tpu.dot_dimension_numbers<[1], [0], [0], [1], [0, 0, 1, 1], [], []>} : vector<8x10xbf16>, vector<10x8xbf16>, vector<8x8xf32> -> vector<8x8xf32>
    %c8_60 = arith.constant 8 : index
    %c8_61 = arith.constant 8 : index
    %182 = vector.load %arg10[%c8_60, %c8_61] : memref<16x32xf32, #tpu.memory_space<vmem>>, vector<8x8xf32>
    tpu.vector_store %arg10[%c8_60, %c8_61], %181 {strides = array<i32>} : memref<16x32xf32, #tpu.memory_space<vmem>>, vector<8x8xf32>,
    %183 = vector.extract_strided_slice %11 {offsets = [8, 16], sizes = [8, 8], strides = [1, 1]} : vector<16x32xf32> to vector<8x8xf32>
    %cst_62 = arith.constant 0.353553385 : f32
    %184 = vector.broadcast %cst_62 : f32 to vector<8x8xf32>
    %185 = arith.mulf %183, %184 : vector<8x8xf32>
    %186 = arith.truncf %185 : vector<8x8xf32> to vector<8x8xbf16>
    %187 = vector.extract_strided_slice %14 {offsets = [10, 16], sizes = [10, 8], strides = [1, 1]} : vector<20x32xf32> to vector<10x8xf32>
    %188 = arith.truncf %187 : vector<10x8xf32> to vector<10x8xbf16>
    %189 = vector.extract_strided_slice %17 {offsets = [10, 16], sizes = [10, 8], strides = [1, 1]} : vector<20x32xf32> to vector<10x8xf32>
    %190 = arith.truncf %189 : vector<10x8xf32> to vector<10x8xbf16>
    %cst_63 = arith.constant dense<0.000000e+00> : vector<8x10xf32>
    %191 = tpu.matmul %186, %188, %cst_63 {dimension_numbers = #tpu.dot_dimension_numbers<[1], [1], [0], [0], [0, 0, 1, 0], [], []>} : vector<8x8xbf16>, vector<10x8xbf16>, vector<8x10xf32> -> vector<8x10xf32>
    %192 = vector.broadcast %130 : i32 to vector<8x10xi32>
    %193 = arith.cmpi slt, %18, %192 : vector<8x10xi32>
    %cst_64 = arith.constant -1.000000e+06 : f32
    %194 = vector.broadcast %cst_64 : f32 to vector<8x10xf32>
    %195 = arith.select %193, %191, %194 : vector<8x10xi1>, vector<8x10xf32>
    %cst_65 = arith.constant dense<0xFF800000> : vector<8xf32>
    %196 = vector.multi_reduction <maximumf>, %195, %cst_65 [1] : vector<8x10xf32> to vector<8xf32>
    %197 = vector.shape_cast %196 : vector<8xf32> to vector<8x1xf32>
    %198 = vector.broadcast %197 : vector<8x1xf32> to vector<8x10xf32>
    %199 = arith.subf %195, %198 : vector<8x10xf32>
    %200 = math.exp %199 : vector<8x10xf32>
    %cst_66 = arith.constant dense<0.000000e+00> : vector<8xf32>
    %201 = vector.multi_reduction <add>, %200, %cst_66 [1] : vector<8x10xf32> to vector<8xf32>
    %202 = vector.shape_cast %201 : vector<8xf32> to vector<8x1xf32>
    %203 = tpu.reciprocal %202 {approx = true} : vector<8x1xf32> -> vector<8x1xf32>
    %204 = vector.broadcast %203 : vector<8x1xf32> to vector<8x10xf32>
    %205 = arith.mulf %200, %204 : vector<8x10xf32>
    %206 = arith.truncf %205 : vector<8x10xf32> to vector<8x10xbf16>
    %cst_67 = arith.constant dense<0.000000e+00> : vector<8x8xf32>
    %207 = tpu.matmul %206, %190, %cst_67 {dimension_numbers = #tpu.dot_dimension_numbers<[1], [0], [0], [1], [0, 0, 1, 1], [], []>} : vector<8x10xbf16>, vector<10x8xbf16>, vector<8x8xf32> -> vector<8x8xf32>
    %c8_68 = arith.constant 8 : index
    %c16_69 = arith.constant 16 : index
    %208 = vector.load %arg10[%c8_68, %c16_69] : memref<16x32xf32, #tpu.memory_space<vmem>>, vector<8x8xf32>
    tpu.vector_store %arg10[%c8_68, %c16_69], %207 {strides = array<i32>} : memref<16x32xf32, #tpu.memory_space<vmem>>, vector<8x8xf32>,
    %209 = vector.extract_strided_slice %11 {offsets = [8, 24], sizes = [8, 8], strides = [1, 1]} : vector<16x32xf32> to vector<8x8xf32>
    %cst_70 = arith.constant 0.353553385 : f32
    %210 = vector.broadcast %cst_70 : f32 to vector<8x8xf32>
    %211 = arith.mulf %209, %210 : vector<8x8xf32>
    %212 = arith.truncf %211 : vector<8x8xf32> to vector<8x8xbf16>
    %213 = vector.extract_strided_slice %14 {offsets = [10, 24], sizes = [10, 8], strides = [1, 1]} : vector<20x32xf32> to vector<10x8xf32>
    %214 = arith.truncf %213 : vector<10x8xf32> to vector<10x8xbf16>
    %215 = vector.extract_strided_slice %17 {offsets = [10, 24], sizes = [10, 8], strides = [1, 1]} : vector<20x32xf32> to vector<10x8xf32>
    %216 = arith.truncf %215 : vector<10x8xf32> to vector<10x8xbf16>
    %cst_71 = arith.constant dense<0.000000e+00> : vector<8x10xf32>
    %217 = tpu.matmul %212, %214, %cst_71 {dimension_numbers = #tpu.dot_dimension_numbers<[1], [1], [0], [0], [0, 0, 1, 0], [], []>} : vector<8x8xbf16>, vector<10x8xbf16>, vector<8x10xf32> -> vector<8x10xf32>
    %218 = vector.broadcast %130 : i32 to vector<8x10xi32>
    %219 = arith.cmpi slt, %18, %218 : vector<8x10xi32>
    %cst_72 = arith.constant -1.000000e+06 : f32
    %220 = vector.broadcast %cst_72 : f32 to vector<8x10xf32>
    %221 = arith.select %219, %217, %220 : vector<8x10xi1>, vector<8x10xf32>
    %cst_73 = arith.constant dense<0xFF800000> : vector<8xf32>
    %222 = vector.multi_reduction <maximumf>, %221, %cst_73 [1] : vector<8x10xf32> to vector<8xf32>
    %223 = vector.shape_cast %222 : vector<8xf32> to vector<8x1xf32>
    %224 = vector.broadcast %223 : vector<8x1xf32> to vector<8x10xf32>
    %225 = arith.subf %221, %224 : vector<8x10xf32>
    %226 = math.exp %225 : vector<8x10xf32>
    %cst_74 = arith.constant dense<0.000000e+00> : vector<8xf32>
    %227 = vector.multi_reduction <add>, %226, %cst_74 [1] : vector<8x10xf32> to vector<8xf32>
    %228 = vector.shape_cast %227 : vector<8xf32> to vector<8x1xf32>
    %229 = tpu.reciprocal %228 {approx = true} : vector<8x1xf32> -> vector<8x1xf32>
    %230 = vector.broadcast %229 : vector<8x1xf32> to vector<8x10xf32>
    %231 = arith.mulf %226, %230 : vector<8x10xf32>
    %232 = arith.truncf %231 : vector<8x10xf32> to vector<8x10xbf16>
    %cst_75 = arith.constant dense<0.000000e+00> : vector<8x8xf32>
    %233 = tpu.matmul %232, %216, %cst_75 {dimension_numbers = #tpu.dot_dimension_numbers<[1], [0], [0], [1], [0, 0, 1, 1], [], []>} : vector<8x10xbf16>, vector<10x8xbf16>, vector<8x8xf32> -> vector<8x8xf32>
    %c8_76 = arith.constant 8 : index
    %c24_77 = arith.constant 24 : index
    %234 = vector.load %arg10[%c8_76, %c24_77] : memref<16x32xf32, #tpu.memory_space<vmem>>, vector<8x8xf32>
    tpu.vector_store %arg10[%c8_76, %c24_77], %233 {strides = array<i32>} : memref<16x32xf32, #tpu.memory_space<vmem>>, vector<8x8xf32>,
    %c0_78 = arith.constant 0 : index
    %c0_79 = arith.constant 0 : index
    %235 = vector.load %arg10[%c0_78, %c0_79] : memref<16x32xf32, #tpu.memory_space<vmem>>, vector<16x32xf32>
    %236 = arith.truncf %235 : vector<16x32xf32> to vector<16x32xbf16>
    %c0_80 = arith.constant 0 : index
    %c0_81 = arith.constant 0 : index
    %237 = vector.load %arg8[%c0_80, %c0_81] : memref<32x32xf32, #tpu.memory_space<vmem>>, vector<32x32xf32>
    %238 = arith.truncf %237 : vector<32x32xf32> to vector<32x32xbf16>
    %cst_82 = arith.constant dense<0.000000e+00> : vector<16x32xf32>
    %239 = tpu.matmul %236, %238, %cst_82 {dimension_numbers = #tpu.dot_dimension_numbers<[1], [0], [0], [1], [0, 0, 1, 1], [], []>} : vector<16x32xbf16>, vector<32x32xbf16>, vector<16x32xf32> -> vector<16x32xf32>
    %240 = vector.shape_cast %239 : vector<16x32xf32> to vector<2x8x32xf32>
    %c0_83 = arith.constant 0 : index
    %c0_84 = arith.constant 0 : index
    %c0_85 = arith.constant 0 : index
    %241 = vector.load %arg9[%c0_83, %c0_84, %c0_85] : memref<2x8x32xf32, #tpu.memory_space<vmem>>, vector<2x8x32xf32>
    tpu.vector_store %arg9[%c0_83, %c0_84, %c0_85], %240 {strides = array<i32>} : memref<2x8x32xf32, #tpu.memory_space<vmem>>, vector<2x8x32xf32>,
    return
  }
  func.func @transform_0(%arg0: i32, %arg1: memref<2xi32, #tpu.memory_space<smem>>) -> (i32, i32, i32) {
    %c0_i32 = arith.constant 0 : i32
    %c0_i32_0 = arith.constant 0 : i32
    %c0_i32_1 = arith.constant 0 : i32
    return %arg0, %c0_i32, %c0_i32_0 : i32, i32, i32
  }
  func.func @transform_1(%arg0: i32, %arg1: memref<2xi32, #tpu.memory_space<smem>>) -> (i32, i32, i32) {
    %c0_i32 = arith.constant 0 : i32
    %c0_i32_0 = arith.constant 0 : i32
    %c0_i32_1 = arith.constant 0 : i32
    return %arg0, %c0_i32, %c0_i32_0 : i32, i32, i32
  }
  func.func @transform_2(%arg0: i32, %arg1: memref<2xi32, #tpu.memory_space<smem>>) -> (i32, i32, i32) {
    %c0_i32 = arith.constant 0 : i32
    %c0_i32_0 = arith.constant 0 : i32
    %c0_i32_1 = arith.constant 0 : i32
    return %arg0, %c0_i32, %c0_i32_0 : i32, i32, i32
  }
  func.func @transform_3(%arg0: i32, %arg1: memref<2xi32, #tpu.memory_space<smem>>) -> (i32, i32) {
    %c0_i32 = arith.constant 0 : i32
    %c0_i32_0 = arith.constant 0 : i32
    %c0_i32_1 = arith.constant 0 : i32
    return %c0_i32, %c0_i32_0 : i32, i32
  }
  func.func @transform_4(%arg0: i32, %arg1: memref<2xi32, #tpu.memory_space<smem>>) -> (i32, i32) {
    %c0_i32 = arith.constant 0 : i32
    %c0_i32_0 = arith.constant 0 : i32
    %c0_i32_1 = arith.constant 0 : i32
    return %c0_i32, %c0_i32_0 : i32, i32
  }
  func.func @transform_5(%arg0: i32, %arg1: memref<2xi32, #tpu.memory_space<smem>>) -> (i32, i32) {
    %c0_i32 = arith.constant 0 : i32
    %c0_i32_0 = arith.constant 0 : i32
    %c0_i32_1 = arith.constant 0 : i32
    return %c0_i32, %c0_i32_0 : i32, i32
  }
  func.func @transform_6(%arg0: i32, %arg1: memref<2xi32, #tpu.memory_space<smem>>) -> (i32, i32) {
    %c0_i32 = arith.constant 0 : i32
    %c0_i32_0 = arith.constant 0 : i32
    %c0_i32_1 = arith.constant 0 : i32
    return %c0_i32, %c0_i32_0 : i32, i32
  }
  func.func @transform_7(%arg0: i32, %arg1: memref<2xi32, #tpu.memory_space<smem>>) -> (i32, i32, i32) {
    %c0_i32 = arith.constant 0 : i32
    %c0_i32_0 = arith.constant 0 : i32
    %c0_i32_1 = arith.constant 0 : i32
    return %arg0, %c0_i32, %c0_i32_0 : i32, i32, i32
  }
}

</mosaic_0001>

<llo_original>
// kernel: tpu_custom_call.1
$region0: #{tpu_custom_call.1}
  #allocation0 [shape = 'u32[]', space=smem, size = 0x4, offset = 0x4, fixed_abs, tag = 'smem constant byte address 0x4 - core index']
  #allocation1 [shape = 'u32[72,128]{1,0:T(1,128)}', space=vmem, size = 0x9000, scoped, tag = 'internal scratch']
  #allocation2 [shape = 'f32[16,32]{1,0:T(8,128)}', space=vmem, size = 0x2000, scoped, tag = 'scratch operand']
  #allocation3 [shape = 's32[1]{0}', space=sflag, size = 0x4, scoped, tag = 'scoped memory for tpu_custom_call.1']
  #allocation4 [shape = 'u8[512]{0}', space=smem, size = 0x200, scoped, tag = 'prefetched SMEM operand 0']
  %s0 = inlined_call_operand.hbm [shape: s32[2], index: 0, kind: input, shape index: {}]
  %s1 = inlined_call_operand.vmem [shape: f32[2,8,24], index: 1, kind: input, shape index: {}]
  %s2 = inlined_call_operand.vmem [shape: f32[2,10,20], index: 2, kind: input, shape index: {}]
  %s3 = inlined_call_operand.vmem [shape: f32[2,10,28], index: 3, kind: input, shape index: {}]
  %s4 = inlined_call_operand.vmem [shape: f32[24,32], index: 4, kind: input, shape index: {}]
  %s5 = inlined_call_operand.hbm [shape: f32[20,32], index: 5, kind: input, shape index: {}]
  %s6 = inlined_call_operand.vmem [shape: f32[28,32], index: 6, kind: input, shape index: {}]
  %s7 = inlined_call_operand.vmem [shape: f32[32,32], index: 7, kind: input, shape index: {}]
  %s8 = inlined_call_operand.hbm [shape: f32[2,8,32], index: 8, kind: output, shape index: {}]
  %s9 = sld [smem:[#allocation0]]
  $region42: #{tpu_custom_call.1} parent=0
    _
  %s11 = ssub.s32 1, %s9
  %s12 = scalar_select 0, %s11, %s9
  %s14 = sshll.u32 %s0, 4
  %s15 = int_to_ptr.hbm [resolvable:$true] %s14
  %17 = dma.hbm_to_smem %s15, 16, [#allocation4], [#allocation3]
  %19 = dma.done [#allocation3], 16
  %20 = sfence
  $region1: #{tpu_custom_call.1} parent=0
    #allocation5 [shape = 'u8[12288]{0}', space=vmem, size = 0x3000, scoped, tag = 'input window, operand 5, single buffered']
    #allocation6 [shape = 's32[1]{0}', space=sflag, size = 0x4, scoped, tag = 'scoped memory for tpu_custom_call.1']
    #allocation7 [shape = 's32[1]{0}', space=sflag, size = 0x4, scoped, tag = 'scoped memory for tpu_custom_call.1']
    #allocation8 [shape = 'u8[8192]{0}', space=vmem, size = 0x2000, scoped, tag = 'output window, operand 0, single buffered']
    %21 = vsyncpa [#allocation6], 0
    %22 = vsyncpa [#allocation7], 0
    // Predicated region
    $region2: #{tpu_custom_call.1} parent=1 // pred_check
      _
    $region3: #{tpu_custom_call.1} parent=1 // pred_check_branch
      %24 = sbr.rel (0) target = $region5
    $region4: #{tpu_custom_call.1} parent=1 // pred_region
      _
    $region5: #{tpu_custom_call.1} parent=1 // pred_fallthru
      _
    // Predicated region
    $region6: #{tpu_custom_call.1} parent=1 // pred_check
      _
    $region7: #{tpu_custom_call.1} parent=1 // pred_check_branch
      %26 = sbr.rel (0) target = $region9
    $region8: #{tpu_custom_call.1} parent=1 // pred_region
      _
    $region9: #{tpu_custom_call.1} parent=1 // pred_fallthru
      _
    // Predicated region
    $region10: #{tpu_custom_call.1} parent=1 // pred_check
      _
    $region11: #{tpu_custom_call.1} parent=1 // pred_check_branch
      %28 = sbr.rel (0) target = $region13
    $region12: #{tpu_custom_call.1} parent=1 // pred_region
      _
    $region13: #{tpu_custom_call.1} parent=1 // pred_fallthru
      _
    // Predicated region
    $region14: #{tpu_custom_call.1} parent=1 // pred_check
      _
    $region15: #{tpu_custom_call.1} parent=1 // pred_check_branch
      %30 = sbr.rel (0) target = $region17
    $region16: #{tpu_custom_call.1} parent=1 // pred_region
      _
    $region17: #{tpu_custom_call.1} parent=1 // pred_fallthru
      _
    // Predicated region
    $region18: #{tpu_custom_call.1} parent=1 // pred_check
      _
    $region19: #{tpu_custom_call.1} parent=1 // pred_check_branch
      %32 = sbr.rel (0) target = $region21
    $region20: #{tpu_custom_call.1} parent=1 // pred_region
      %34 = vsyncadd [#allocation6], 0
      %s35 = sshll.u32 %s5, 4
      %s36 = int_to_ptr.hbm [resolvable:$true] %s35
      %s37 = sshll.u32 [#allocation5], 4
      %s38 = int_to_ptr.vmem [resolvable:$true] %s37
      %43 = dma.hbm_to_vmem [thread:$0]  %s36, 384, %s38, [#allocation6], 128, 128, 8
    $region21: #{tpu_custom_call.1} parent=1 // pred_fallthru
      _
    // Predicated region
    $region22: #{tpu_custom_call.1} parent=1 // pred_check
      _
    $region23: #{tpu_custom_call.1} parent=1 // pred_check_branch
      %45 = sbr.rel (0) target = $region25
    $region24: #{tpu_custom_call.1} parent=1 // pred_region
      _
    $region25: #{tpu_custom_call.1} parent=1 // pred_fallthru
      _
    // Predicated region
    $region26: #{tpu_custom_call.1} parent=1 // pred_check
      _
    $region27: #{tpu_custom_call.1} parent=1 // pred_check_branch
      %47 = sbr.rel (0) target = $region29
    $region28: #{tpu_custom_call.1} parent=1 // pred_region
      _
    $region29: #{tpu_custom_call.1} parent=1 // pred_fallthru
      _
    // Predicated region
    $region30: #{tpu_custom_call.1} parent=1 // pred_check
      _
    $region31: #{tpu_custom_call.1} parent=1 // pred_check_branch
      %49 = sbr.rel (0) target = $region33
    $region32: #{tpu_custom_call.1} parent=1 // pred_region
      %51 = dma.done [#allocation6], 384
    $region33: #{tpu_custom_call.1} parent=1 // pred_fallthru
      _
    %v53 = vld [vmem:[%s1] sm:$0xff]
    %v54 = vld [vmem:[%s1 + $0x8] sm:$0xff]
    %v55 = vpack.c.bf16 %v54, %v53
    %v56 = vld [vmem:[%s2] sm:$0xff]
    %v57 = vld [vmem:[%s2 + $0x8] sm:$0x3]
    %v58 = vld [vmem:[%s2 + $0x10] sm:$0xff]
    %v59 = vld [vmem:[%s2 + $0x18] sm:$0x3]
    %v64 = vrot.slane %v56, 2
    %v65 = vrot.slane %v56, 4
    %v66 = vrot.slane %v56, 6
    %v67 = vrot.slane %v58, 2
    %v68 = vrot.slane %v58, 4
    %v69 = vrot.slane %v58, 6
    %70 = vst [vmem:[#allocation1] ss:$4 sm:$0xff] %v56
    %s71 = scalar_lea.vmem [#allocation1], 1
    %72 = vst [vmem:[%s71] ss:$4 sm:$0xff] %v64
    %s73 = scalar_lea.vmem [#allocation1], 2
    %74 = vst [vmem:[%s73] ss:$4 sm:$0xff] %v65
    %s75 = scalar_lea.vmem [#allocation1], 3
    %76 = vst [vmem:[%s75] ss:$4 sm:$0xff] %v66
    %s77 = scalar_lea.vmem [#allocation1], 32
    %78 = vst [vmem:[%s77] ss:$4 sm:$0xff] %v57
    %s79 = scalar_lea.vmem [#allocation1], 33
    %80 = vst [vmem:[%s79] ss:$4 sm:$0xff] %v58
    %s81 = scalar_lea.vmem [#allocation1], 34
    %82 = vst [vmem:[%s81] ss:$4 sm:$0xff] %v67
    %s83 = scalar_lea.vmem [#allocation1], 35
    %84 = vst [vmem:[%s83] ss:$4 sm:$0xff] %v68
    %v85 = vld.sshfl [vmem:[#allocation1] sm:$0xff pattern:$0x73625140]
    %v86 = vld.sshfl [vmem:[#allocation1 + $0x20] sm:$0xff pattern:$0x73625140]
    %87 = vst [vmem:[#allocation1] ss:$4 sm:$0xff] %v69
    %88 = vst [vmem:[%s71] ss:$4 sm:$0xff] %v59
    %v89 = vld.sshfl [vmem:[#allocation1] sm:$0xff pattern:$0x73625140]
    %v93 = vpack.c.bf16 %v86, %v85
    %v94 = vpack.c.bf16 %v89, %v89
    %v95 = vld [vmem:[%s3] sm:$0xff]
    %v96 = vld [vmem:[%s3 + $0x8] sm:$0x3]
    %v97 = vld [vmem:[%s3 + $0x10] sm:$0xff]
    %v98 = vld [vmem:[%s3 + $0x18] sm:$0x3]
    %v103 = vrot.slane %v95, 2
    %v104 = vrot.slane %v95, 4
    %v105 = vrot.slane %v95, 6
    %v106 = vrot.slane %v97, 2
    %v107 = vrot.slane %v97, 4
    %v108 = vrot.slane %v97, 6
    %109 = vst [vmem:[#allocation1] ss:$4 sm:$0xff] %v95
    %s110 = scalar_lea.vmem [#allocation1], 1
    %111 = vst [vmem:[%s110] ss:$4 sm:$0xff] %v103
    %s112 = scalar_lea.vmem [#allocation1], 2
    %113 = vst [vmem:[%s112] ss:$4 sm:$0xff] %v104
    %s114 = scalar_lea.vmem [#allocation1], 3
    %115 = vst [vmem:[%s114] ss:$4 sm:$0xff] %v105
    %s116 = scalar_lea.vmem [#allocation1], 32
    %117 = vst [vmem:[%s116] ss:$4 sm:$0xff] %v96
    %s118 = scalar_lea.vmem [#allocation1], 33
    %119 = vst [vmem:[%s118] ss:$4 sm:$0xff] %v97
    %s120 = scalar_lea.vmem [#allocation1], 34
    %121 = vst [vmem:[%s120] ss:$4 sm:$0xff] %v106
    %s122 = scalar_lea.vmem [#allocation1], 35
    %123 = vst [vmem:[%s122] ss:$4 sm:$0xff] %v107
    %v124 = vld.sshfl [vmem:[#allocation1] sm:$0xff pattern:$0x73625140]
    %v125 = vld.sshfl [vmem:[#allocation1 + $0x20] sm:$0xff pattern:$0x73625140]
    %126 = vst [vmem:[#allocation1] ss:$4 sm:$0xff] %v108
    %127 = vst [vmem:[%s110] ss:$4 sm:$0xff] %v98
    %v128 = vld.sshfl [vmem:[#allocation1] sm:$0xff pattern:$0x73625140]
    %v132 = vpack.c.bf16 %v125, %v124
    %v133 = vpack.c.bf16 %v128, %v128
    %v134 = vld [vmem:[%s4] sm:$0xff]
    %v135 = vld [vmem:[%s4 + $0x8] sm:$0xff]
    %v136 = vld [vmem:[%s4 + $0x10] sm:$0xff]
    %v137 = vpack.c.bf16 %v135, %v134
    %v138 = vpack.c.bf16 %v136, %v136
    %vm139 = vcmask 195584
    %v141 = vsel %vm139, %v55, 0
    %vm143 = vcmask 1043456
    %v145 = vsel %vm143, %v138, 0
    %147 = vmatpush.bf16.msra.mxu0 0
    %148 = vmatpush.bf16.msra.mxu0 0
    %149 = vmatpush.bf16.msra.mxu0 0
    %150 = vmatpush.bf16.msra.mxu0 0
    %151 = vmatpush.bf16.msra.mxu0 0
    %152 = vmatpush.bf16.msra.mxu0 0
    %153 = vmatpush.bf16.msra.mxu0 %v145
    %154 = vmatpush.bf16.msra.mxu0 %v137
    %155 = vmatmul.bf16.gmra.mxu0 %v141
    %v156 = vpop.f32.mrf.mxu0
    %v157 = vadd.f32 0.0, %v156
    %v158 = vpop.f32.mrf.mxu0
    %v159 = vadd.f32 0.0, %v158
    %160 = vdwg.mxu0
    %v161 = vld [vmem:[#allocation5] sm:$0xff]
    %v162 = vld [vmem:[#allocation5 + $0x8] sm:$0xff]
    %v163 = vld [vmem:[#allocation5 + $0x10] sm:$0xf]
    %v164 = vpack.c.bf16 %v162, %v161
    %v165 = vpack.c.bf16 %v163, %v163
    %vm166 = vcmask 162816
    %v168 = vsel %vm166, %v93, 0
    %v171 = vsel %vm166, %v94, 0
    %vm173 = vcmask 1041408
    %v175 = vsel %vm173, %v165, 0
    %177 = vmatpush.bf16.msra.mxu0 0
    %178 = vmatpush.bf16.msra.mxu0 0
    %179 = vmatpush.bf16.msra.mxu0 0
    %180 = vmatpush.bf16.msra.mxu0 0
    %181 = vmatpush.bf16.msra.mxu0 0
    %182 = vmatpush.bf16.msra.mxu0 0
    %183 = vmatpush.bf16.msra.mxu0 %v175
    %184 = vmatpush.bf16.msra.mxu0 %v164
    %185 = vmatmul.bf16.gmra.mxu0 %v168
    %v186 = vpop.f32.mrf.mxu0
    %v187 = vadd.f32 0.0, %v186
    %v188 = vpop.f32.mrf.mxu0
    %v189 = vadd.f32 0.0, %v188
    %190 = vmatmul.bf16.gmra.mxu0 %v171
    %v191 = vpop.f32.mrf.mxu0
    %v192 = vadd.f32 0.0, %v191
    %v193 = vpop.f32.mrf.mxu0
    %194 = vdwg.mxu0
    %v195 = vld [vmem:[%s6] sm:$0xff]
    %v196 = vld [vmem:[%s6 + $0x8] sm:$0xff]
    %v197 = vld [vmem:[%s6 + $0x10] sm:$0xff]
    %v198 = vld [vmem:[%s6 + $0x18] sm:$0xf]
    %v199 = vpack.c.bf16 %v196, %v195
    %v200 = vpack.c.bf16 %v198, %v197
    %vm201 = vcmask 228352
    %v203 = vsel %vm201, %v132, 0
    %v206 = vsel %vm201, %v133, 0
    %vm208 = vcmask 1045504
    %v210 = vsel %vm208, %v200, 0
    %212 = vmatpush.bf16.msra.mxu0 0
    %213 = vmatpush.bf16.msra.mxu0 0
    %214 = vmatpush.bf16.msra.mxu0 0
    %215 = vmatpush.bf16.msra.mxu0 0
    %216 = vmatpush.bf16.msra.mxu0 0
    %217 = vmatpush.bf16.msra.mxu0 0
    %218 = vmatpush.bf16.msra.mxu0 %v210
    %219 = vmatpush.bf16.msra.mxu0 %v199
    %220 = vmatmul.bf16.gmra.mxu0 %v203
    %v221 = vpop.f32.mrf.mxu0
    %v222 = vadd.f32 0.0, %v221
    %v223 = vpop.f32.mrf.mxu0
    %v224 = vadd.f32 0.0, %v223
    %225 = vmatmul.bf16.gmra.mxu0 %v206
    %v226 = vpop.f32.mrf.mxu0
    %v227 = vadd.f32 0.0, %v226
    %v228 = vpop.f32.mrf.mxu0
    %229 = vdwg.mxu0
    %v230 = vlaneseq
    %v231 = vand.u32 %v230, 127
    %s232 = smul.u32 0, 2
    %s233 = sld [smem:[#allocation4 + %s232]]
    %v234 = vmul.f32 %v157, 0.35355338
    %v235 = vpack.c.bf16 %v234, %v234
    %v236 = vpack.c.bf16 %v189, %v187
    %v237 = vpack.c.bf16 %v224, %v222
    %vm238 = vcmask 64512
    %v240 = vsel %vm238, %v235, 0
    %v243 = vsel %vm238, %v236, 0
    %245 = vmatpush.bf16.xpose.msra.mxu0 0
    %246 = vmatpush.bf16.xpose.msra.mxu0 0
    %247 = vmatpush.bf16.xpose.msra.mxu0 0
    %248 = vmatpush.bf16.xpose.msra.mxu0 0
    %249 = vmatpush.bf16.xpose.msra.mxu0 0
    %250 = vmatpush.bf16.xpose.msra.mxu0 0
    %251 = vmatpush.bf16.xpose.msra.mxu0 0
    %252 = vmatpush.bf16.xpose.msra.mxu0 %v243
    %253 = vmatmul.bf16.gmra.mxu0 %v240
    %v254 = vpop.f32.mrf.mxu0
    %v255 = vadd.f32 0.0, %v254
    %v256 = vpop.f32.mrf.mxu0
    %257 = vdwg.mxu0
    %v258 = vstv %s233
    %vm259 = vcmp.lt.s32.totalorder %v231, %v258
    %v260 = vsel %vm259, %v255, -1000000.0
    %vm261 = vcmask 80896
    %v262 = vsel %vm261, %v260, -inf
    %263 = vmax.xlane.f32.xlu0 %v262
    %v264 = vpop.xlane.xlu0 %263
    %v265 = vsub.f32 %v260, %v264
    %v266 = vmul.f32 %v265, 1.442695
    %v267 = vpow.pop %v266
    %v268 = vsel %vm261, %v267, 0.0
    %269 = vadd.xlane.f32.xlu0 %v268
    %v270 = vpop.xlane.xlu0 %269
    %v271 = vrcp.pop %v270
    %v272 = vmul.f32 %v267, %v271
    %v273 = vpack.c.bf16 %v272, %v272
    %v275 = vsel %vm261, %v273, 0
    %vm277 = vcmask 1044480
    %v279 = vsel %vm277, %v237, 0
    %281 = vmatpush.bf16.msra.mxu0 0
    %282 = vmatpush.bf16.msra.mxu0 0
    %283 = vmatpush.bf16.msra.mxu0 0
    %284 = vmatpush.bf16.msra.mxu0 0
    %285 = vmatpush.bf16.msra.mxu0 0
    %286 = vmatpush.bf16.msra.mxu0 0
    %287 = vmatpush.bf16.msra.mxu0 0
    %288 = vmatpush.bf16.msra.mxu0 %v279
    %289 = vmatmul.bf16.gmra.mxu0 %v275
    %v290 = vpop.f32.mrf.mxu0
    %v291 = vadd.f32 0.0, %v290
    %v292 = vpop.f32.mrf.mxu0
    %293 = vdwg.mxu0
    %294 = vst.msk [vmem:[#allocation2] sm:$0xff] %vm238, %v291
    %296 = vrot.lane.b32.xlu0 %v235, 120
    %v297 = vpop.permute.xlu0 %296
    %299 = vrot.lane.b32.xlu0 %v236, 120
    %v300 = vpop.permute.xlu0 %299
    %v302 = vsel %vm238, %v297, 0
    %v305 = vsel %vm238, %v300, 0
    %307 = vmatpush.bf16.xpose.msra.mxu0 0
    %308 = vmatpush.bf16.xpose.msra.mxu0 0
    %309 = vmatpush.bf16.xpose.msra.mxu0 0
    %310 = vmatpush.bf16.xpose.msra.mxu0 0
    %311 = vmatpush.bf16.xpose.msra.mxu0 0
    %312 = vmatpush.bf16.xpose.msra.mxu0 0
    %313 = vmatpush.bf16.xpose.msra.mxu0 0
    %314 = vmatpush.bf16.xpose.msra.mxu0 %v305
    %315 = vmatmul.bf16.gmra.mxu0 %v302
    %v316 = vpop.f32.mrf.mxu0
    %v317 = vadd.f32 0.0, %v316
    %v318 = vpop.f32.mrf.mxu0
    %319 = vdwg.mxu0
    %v320 = vsel %vm259, %v317, -1000000.0
    %v321 = vsel %vm261, %v320, -inf
    %322 = vmax.xlane.f32.xlu0 %v321
    %v323 = vpop.xlane.xlu0 %322
    %v324 = vsub.f32 %v320, %v323
    %v325 = vmul.f32 %v324, 1.442695
    %v326 = vpow.pop %v325
    %v327 = vsel %vm261, %v326, 0.0
    %328 = vadd.xlane.f32.xlu0 %v327
    %v329 = vpop.xlane.xlu0 %328
    %v330 = vrcp.pop %v329
    %v331 = vmul.f32 %v326, %v330
    %v332 = vpack.c.bf16 %v331, %v331
    %334 = vrot.lane.b32.xlu0 %v237, 120
    %v335 = vpop.permute.xlu0 %334
    %v337 = vsel %vm261, %v332, 0
    %v340 = vsel %vm277, %v335, 0
    %342 = vmatpush.bf16.msra.mxu0 0
    %343 = vmatpush.bf16.msra.mxu0 0
    %344 = vmatpush.bf16.msra.mxu0 0
    %345 = vmatpush.bf16.msra.mxu0 0
    %346 = vmatpush.bf16.msra.mxu0 0
    %347 = vmatpush.bf16.msra.mxu0 0
    %348 = vmatpush.bf16.msra.mxu0 0
    %349 = vmatpush.bf16.msra.mxu0 %v340
    %350 = vmatmul.bf16.gmra.mxu0 %v337
    %v351 = vpop.f32.mrf.mxu0
    %v352 = vadd.f32 0.0, %v351
    %v353 = vpop.f32.mrf.mxu0
    %354 = vdwg.mxu0
    %356 = vrot.lane.b32.xlu0 %v352, 8
    %v357 = vpop.permute.xlu0 %356
    %vm359 = vcmask 130112
    %360 = vst.msk [vmem:[#allocation2] sm:$0xff] %vm359, %v357
    %361 = vrot.lane.b32.xlu0 %v235, 112
    %v362 = vpop.permute.xlu0 %361
    %363 = vrot.lane.b32.xlu0 %v236, 112
    %v364 = vpop.permute.xlu0 %363
    %v366 = vsel %vm238, %v362, 0
    %v369 = vsel %vm238, %v364, 0
    %371 = vmatpush.bf16.xpose.msra.mxu0 0
    %372 = vmatpush.bf16.xpose.msra.mxu0 0
    %373 = vmatpush.bf16.xpose.msra.mxu0 0
    %374 = vmatpush.bf16.xpose.msra.mxu0 0
    %375 = vmatpush.bf16.xpose.msra.mxu0 0
    %376 = vmatpush.bf16.xpose.msra.mxu0 0
    %377 = vmatpush.bf16.xpose.msra.mxu0 0
    %378 = vmatpush.bf16.xpose.msra.mxu0 %v369
    %379 = vmatmul.bf16.gmra.mxu0 %v366
    %v380 = vpop.f32.mrf.mxu0
    %v381 = vadd.f32 0.0, %v380
    %v382 = vpop.f32.mrf.mxu0
    %383 = vdwg.mxu0
    %v384 = vsel %vm259, %v381, -1000000.0
    %v385 = vsel %vm261, %v384, -inf
    %386 = vmax.xlane.f32.xlu0 %v385
    %v387 = vpop.xlane.xlu0 %386
    %v388 = vsub.f32 %v384, %v387
    %v389 = vmul.f32 %v388, 1.442695
    %v390 = vpow.pop %v389
    %v391 = vsel %vm261, %v390, 0.0
    %392 = vadd.xlane.f32.xlu0 %v391
    %v393 = vpop.xlane.xlu0 %392
    %v394 = vrcp.pop %v393
    %v395 = vmul.f32 %v390, %v394
    %v396 = vpack.c.bf16 %v395, %v395
    %397 = vrot.lane.b32.xlu0 %v237, 112
    %v398 = vpop.permute.xlu0 %397
    %v400 = vsel %vm261, %v396, 0
    %v403 = vsel %vm277, %v398, 0
    %405 = vmatpush.bf16.msra.mxu0 0
    %406 = vmatpush.bf16.msra.mxu0 0
    %407 = vmatpush.bf16.msra.mxu0 0
    %408 = vmatpush.bf16.msra.mxu0 0
    %409 = vmatpush.bf16.msra.mxu0 0
    %410 = vmatpush.bf16.msra.mxu0 0
    %411 = vmatpush.bf16.msra.mxu0 0
    %412 = vmatpush.bf16.msra.mxu0 %v403
    %413 = vmatmul.bf16.gmra.mxu0 %v400
    %v414 = vpop.f32.mrf.mxu0
    %v415 = vadd.f32 0.0, %v414
    %v416 = vpop.f32.mrf.mxu0
    %417 = vdwg.mxu0
    %419 = vrot.lane.b32.xlu0 %v415, 16
    %v420 = vpop.permute.xlu0 %419
    %vm422 = vcmask 195712
    %423 = vst.msk [vmem:[#allocation2] sm:$0xff] %vm422, %v420
    %424 = vrot.lane.b32.xlu0 %v235, 104
    %v425 = vpop.permute.xlu0 %424
    %426 = vrot.lane.b32.xlu0 %v236, 104
    %v427 = vpop.permute.xlu0 %426
    %v429 = vsel %vm238, %v425, 0
    %v432 = vsel %vm238, %v427, 0
    %434 = vmatpush.bf16.xpose.msra.mxu0 0
    %435 = vmatpush.bf16.xpose.msra.mxu0 0
    %436 = vmatpush.bf16.xpose.msra.mxu0 0
    %437 = vmatpush.bf16.xpose.msra.mxu0 0
    %438 = vmatpush.bf16.xpose.msra.mxu0 0
    %439 = vmatpush.bf16.xpose.msra.mxu0 0
    %440 = vmatpush.bf16.xpose.msra.mxu0 0
    %441 = vmatpush.bf16.xpose.msra.mxu0 %v432
    %442 = vmatmul.bf16.gmra.mxu0 %v429
    %v443 = vpop.f32.mrf.mxu0
    %v444 = vadd.f32 0.0, %v443
    %v445 = vpop.f32.mrf.mxu0
    %446 = vdwg.mxu0
    %v447 = vsel %vm259, %v444, -1000000.0
    %v448 = vsel %vm261, %v447, -inf
    %449 = vmax.xlane.f32.xlu0 %v448
    %v450 = vpop.xlane.xlu0 %449
    %v451 = vsub.f32 %v447, %v450
    %v452 = vmul.f32 %v451, 1.442695
    %v453 = vpow.pop %v452
    %v454 = vsel %vm261, %v453, 0.0
    %455 = vadd.xlane.f32.xlu0 %v454
    %v456 = vpop.xlane.xlu0 %455
    %v457 = vrcp.pop %v456
    %v458 = vmul.f32 %v453, %v457
    %v459 = vpack.c.bf16 %v458, %v458
    %460 = vrot.lane.b32.xlu0 %v237, 104
    %v461 = vpop.permute.xlu0 %460
    %v463 = vsel %vm261, %v459, 0
    %v466 = vsel %vm277, %v461, 0
    %468 = vmatpush.bf16.msra.mxu0 0
    %469 = vmatpush.bf16.msra.mxu0 0
    %470 = vmatpush.bf16.msra.mxu0 0
    %471 = vmatpush.bf16.msra.mxu0 0
    %472 = vmatpush.bf16.msra.mxu0 0
    %473 = vmatpush.bf16.msra.mxu0 0
    %474 = vmatpush.bf16.msra.mxu0 0
    %475 = vmatpush.bf16.msra.mxu0 %v466
    %476 = vmatmul.bf16.gmra.mxu0 %v463
    %v477 = vpop.f32.mrf.mxu0
    %v478 = vadd.f32 0.0, %v477
    %v479 = vpop.f32.mrf.mxu0
    %480 = vdwg.mxu0
    %482 = vrot.lane.b32.xlu0 %v478, 24
    %v483 = vpop.permute.xlu0 %482
    %vm485 = vcmask 261312
    %486 = vst.msk [vmem:[#allocation2] sm:$0xff] %vm485, %v483
    %s487 = sadd.s32 %s232, 1
    %s488 = sld [smem:[#allocation4 + %s487]]
    %v489 = vmul.f32 %v159, 0.35355338
    %v490 = vpack.c.bf16 %v489, %v489
    %v491 = vpack.c.bf16 %v192, %v189
    %v492 = vpack.c.bf16 %v227, %v224
    %v494 = vrot.slane %v491, 1
    %v496 = vsel %vm238, %v490, 0
    %v499 = vsel %vm238, %v494, 0
    %501 = vmatpush.bf16.xpose.msra.mxu0 0
    %502 = vmatpush.bf16.xpose.msra.mxu0 0
    %503 = vmatpush.bf16.xpose.msra.mxu0 0
    %504 = vmatpush.bf16.xpose.msra.mxu0 0
    %505 = vmatpush.bf16.xpose.msra.mxu0 0
    %506 = vmatpush.bf16.xpose.msra.mxu0 0
    %507 = vmatpush.bf16.xpose.msra.mxu0 0
    %508 = vmatpush.bf16.xpose.msra.mxu0 %v499
    %509 = vmatmul.bf16.gmra.mxu0 %v496
    %v510 = vpop.f32.mrf.mxu0
    %v511 = vadd.f32 0.0, %v510
    %v512 = vpop.f32.mrf.mxu0
    %513 = vdwg.mxu0
    %v514 = vstv %s488
    %vm515 = vcmp.lt.s32.totalorder %v231, %v514
    %v516 = vsel %vm515, %v511, -1000000.0
    %v517 = vsel %vm261, %v516, -inf
    %518 = vmax.xlane.f32.xlu0 %v517
    %v519 = vpop.xlane.xlu0 %518
    %v520 = vsub.f32 %v516, %v519
    %v521 = vmul.f32 %v520, 1.442695
    %v522 = vpow.pop %v521
    %v523 = vsel %vm261, %v522, 0.0
    %524 = vadd.xlane.f32.xlu0 %v523
    %v525 = vpop.xlane.xlu0 %524
    %v526 = vrcp.pop %v525
    %v527 = vmul.f32 %v522, %v526
    %v528 = vpack.c.bf16 %v527, %v527
    %v530 = vrot.slane %v492, 1
    %v532 = vsel %vm261, %v528, 0
    %v535 = vsel %vm277, %v530, 0
    %537 = vmatpush.bf16.msra.mxu0 0
    %538 = vmatpush.bf16.msra.mxu0 0
    %539 = vmatpush.bf16.msra.mxu0 0
    %540 = vmatpush.bf16.msra.mxu0 0
    %541 = vmatpush.bf16.msra.mxu0 0
    %542 = vmatpush.bf16.msra.mxu0 0
    %543 = vmatpush.bf16.msra.mxu0 0
    %544 = vmatpush.bf16.msra.mxu0 %v535
    %545 = vmatmul.bf16.gmra.mxu0 %v532
    %v546 = vpop.f32.mrf.mxu0
    %v547 = vadd.f32 0.0, %v546
    %v548 = vpop.f32.mrf.mxu0
    %549 = vdwg.mxu0
    %550 = vst.msk [vmem:[#allocation2 + $0x8] sm:$0xff] %vm238, %v547
    %552 = vrot.lane.b32.xlu0 %v490, 120
    %v553 = vpop.permute.xlu0 %552
    %554 = vrot.lane.b32.xlu0 %v494, 120
    %v555 = vpop.permute.xlu0 %554
    %v557 = vsel %vm238, %v553, 0
    %v560 = vsel %vm238, %v555, 0
    %562 = vmatpush.bf16.xpose.msra.mxu0 0
    %563 = vmatpush.bf16.xpose.msra.mxu0 0
    %564 = vmatpush.bf16.xpose.msra.mxu0 0
    %565 = vmatpush.bf16.xpose.msra.mxu0 0
    %566 = vmatpush.bf16.xpose.msra.mxu0 0
    %567 = vmatpush.bf16.xpose.msra.mxu0 0
    %568 = vmatpush.bf16.xpose.msra.mxu0 0
    %569 = vmatpush.bf16.xpose.msra.mxu0 %v560
    %570 = vmatmul.bf16.gmra.mxu0 %v557
    %v571 = vpop.f32.mrf.mxu0
    %v572 = vadd.f32 0.0, %v571
    %v573 = vpop.f32.mrf.mxu0
    %574 = vdwg.mxu0
    %v575 = vsel %vm515, %v572, -1000000.0
    %v576 = vsel %vm261, %v575, -inf
    %577 = vmax.xlane.f32.xlu0 %v576
    %v578 = vpop.xlane.xlu0 %577
    %v579 = vsub.f32 %v575, %v578
    %v580 = vmul.f32 %v579, 1.442695
    %v581 = vpow.pop %v580
    %v582 = vsel %vm261, %v581, 0.0
    %583 = vadd.xlane.f32.xlu0 %v582
    %v584 = vpop.xlane.xlu0 %583
    %v585 = vrcp.pop %v584
    %v586 = vmul.f32 %v581, %v585
    %v587 = vpack.c.bf16 %v586, %v586
    %588 = vrot.lane.b32.xlu0 %v530, 120
    %v589 = vpop.permute.xlu0 %588
    %v591 = vsel %vm261, %v587, 0
    %v594 = vsel %vm277, %v589, 0
    %596 = vmatpush.bf16.msra.mxu0 0
    %597 = vmatpush.bf16.msra.mxu0 0
    %598 = vmatpush.bf16.msra.mxu0 0
    %599 = vmatpush.bf16.msra.mxu0 0
    %600 = vmatpush.bf16.msra.mxu0 0
    %601 = vmatpush.bf16.msra.mxu0 0
    %602 = vmatpush.bf16.msra.mxu0 0
    %603 = vmatpush.bf16.msra.mxu0 %v594
    %604 = vmatmul.bf16.gmra.mxu0 %v591
    %v605 = vpop.f32.mrf.mxu0
    %v606 = vadd.f32 0.0, %v605
    %v607 = vpop.f32.mrf.mxu0
    %608 = vdwg.mxu0
    %610 = vrot.lane.b32.xlu0 %v606, 8
    %v611 = vpop.permute.xlu0 %610
    %613 = vst.msk [vmem:[#allocation2 + $0x8] sm:$0xff] %vm359, %v611
    %614 = vrot.lane.b32.xlu0 %v490, 112
    %v615 = vpop.permute.xlu0 %614
    %616 = vrot.lane.b32.xlu0 %v494, 112
    %v617 = vpop.permute.xlu0 %616
    %v619 = vsel %vm238, %v615, 0
    %v622 = vsel %vm238, %v617, 0
    %624 = vmatpush.bf16.xpose.msra.mxu0 0
    %625 = vmatpush.bf16.xpose.msra.mxu0 0
    %626 = vmatpush.bf16.xpose.msra.mxu0 0
    %627 = vmatpush.bf16.xpose.msra.mxu0 0
    %628 = vmatpush.bf16.xpose.msra.mxu0 0
    %629 = vmatpush.bf16.xpose.msra.mxu0 0
    %630 = vmatpush.bf16.xpose.msra.mxu0 0
    %631 = vmatpush.bf16.xpose.msra.mxu0 %v622
    %632 = vmatmul.bf16.gmra.mxu0 %v619
    %v633 = vpop.f32.mrf.mxu0
    %v634 = vadd.f32 0.0, %v633
    %v635 = vpop.f32.mrf.mxu0
    %636 = vdwg.mxu0
    %v637 = vsel %vm515, %v634, -1000000.0
    %v638 = vsel %vm261, %v637, -inf
    %639 = vmax.xlane.f32.xlu0 %v638
    %v640 = vpop.xlane.xlu0 %639
    %v641 = vsub.f32 %v637, %v640
    %v642 = vmul.f32 %v641, 1.442695
    %v643 = vpow.pop %v642
    %v644 = vsel %vm261, %v643, 0.0
    %645 = vadd.xlane.f32.xlu0 %v644
    %v646 = vpop.xlane.xlu0 %645
    %v647 = vrcp.pop %v646
    %v648 = vmul.f32 %v643, %v647
    %v649 = vpack.c.bf16 %v648, %v648
    %650 = vrot.lane.b32.xlu0 %v530, 112
    %v651 = vpop.permute.xlu0 %650
    %v653 = vsel %vm261, %v649, 0
    %v656 = vsel %vm277, %v651, 0
    %658 = vmatpush.bf16.msra.mxu0 0
    %659 = vmatpush.bf16.msra.mxu0 0
    %660 = vmatpush.bf16.msra.mxu0 0
    %661 = vmatpush.bf16.msra.mxu0 0
    %662 = vmatpush.bf16.msra.mxu0 0
    %663 = vmatpush.bf16.msra.mxu0 0
    %664 = vmatpush.bf16.msra.mxu0 0
    %665 = vmatpush.bf16.msra.mxu0 %v656
    %666 = vmatmul.bf16.gmra.mxu0 %v653
    %v667 = vpop.f32.mrf.mxu0
    %v668 = vadd.f32 0.0, %v667
    %v669 = vpop.f32.mrf.mxu0
    %670 = vdwg.mxu0
    %672 = vrot.lane.b32.xlu0 %v668, 16
    %v673 = vpop.permute.xlu0 %672
    %675 = vst.msk [vmem:[#allocation2 + $0x8] sm:$0xff] %vm422, %v673
    %676 = vrot.lane.b32.xlu0 %v490, 104
    %v677 = vpop.permute.xlu0 %676
    %678 = vrot.lane.b32.xlu0 %v494, 104
    %v679 = vpop.permute.xlu0 %678
    %v681 = vsel %vm238, %v677, 0
    %v684 = vsel %vm238, %v679, 0
    %686 = vmatpush.bf16.xpose.msra.mxu0 0
    %687 = vmatpush.bf16.xpose.msra.mxu0 0
    %688 = vmatpush.bf16.xpose.msra.mxu0 0
    %689 = vmatpush.bf16.xpose.msra.mxu0 0
    %690 = vmatpush.bf16.xpose.msra.mxu0 0
    %691 = vmatpush.bf16.xpose.msra.mxu0 0
    %692 = vmatpush.bf16.xpose.msra.mxu0 0
    %693 = vmatpush.bf16.xpose.msra.mxu0 %v684
    %694 = vmatmul.bf16.gmra.mxu0 %v681
    %v695 = vpop.f32.mrf.mxu0
    %v696 = vadd.f32 0.0, %v695
    %v697 = vpop.f32.mrf.mxu0
    %698 = vdwg.mxu0
    %v699 = vsel %vm515, %v696, -1000000.0
    %v700 = vsel %vm261, %v699, -inf
    %701 = vmax.xlane.f32.xlu0 %v700
    %v702 = vpop.xlane.xlu0 %701
    %v703 = vsub.f32 %v699, %v702
    %v704 = vmul.f32 %v703, 1.442695
    %v705 = vpow.pop %v704
    %v706 = vsel %vm261, %v705, 0.0
    %707 = vadd.xlane.f32.xlu0 %v706
    %v708 = vpop.xlane.xlu0 %707
    %v709 = vrcp.pop %v708
    %v710 = vmul.f32 %v705, %v709
    %v711 = vpack.c.bf16 %v710, %v710
    %712 = vrot.lane.b32.xlu0 %v530, 104
    %v713 = vpop.permute.xlu0 %712
    %v715 = vsel %vm261, %v711, 0
    %v718 = vsel %vm277, %v713, 0
    %720 = vmatpush.bf16.msra.mxu0 0
    %721 = vmatpush.bf16.msra.mxu0 0
    %722 = vmatpush.bf16.msra.mxu0 0
    %723 = vmatpush.bf16.msra.mxu0 0
    %724 = vmatpush.bf16.msra.mxu0 0
    %725 = vmatpush.bf16.msra.mxu0 0
    %726 = vmatpush.bf16.msra.mxu0 0
    %727 = vmatpush.bf16.msra.mxu0 %v718
    %728 = vmatmul.bf16.gmra.mxu0 %v715
    %v729 = vpop.f32.mrf.mxu0
    %v730 = vadd.f32 0.0, %v729
    %v731 = vpop.f32.mrf.mxu0
    %732 = vdwg.mxu0
    %734 = vrot.lane.b32.xlu0 %v730, 24
    %v735 = vpop.permute.xlu0 %734
    %737 = vst.msk [vmem:[#allocation2 + $0x8] sm:$0xff] %vm485, %v735
    %v738 = vld [vmem:[#allocation2] sm:$0xff]
    %v739 = vld [vmem:[#allocation2 + $0x8] sm:$0xff]
    %v740 = vpack.c.bf16 %v739, %v738
    %v741 = vld [vmem:[%s7] sm:$0xff]
    %v742 = vld [vmem:[%s7 + $0x8] sm:$0xff]
    %v743 = vld [vmem:[%s7 + $0x10] sm:$0xff]
    %v744 = vld [vmem:[%s7 + $0x18] sm:$0xff]
    %v745 = vpack.c.bf16 %v742, %v741
    %v746 = vpack.c.bf16 %v744, %v743
    %vm747 = vcmask 261120
    %v749 = vsel %vm747, %v740, 0
    %751 = vmatpush.bf16.msra.mxu0 0
    %752 = vmatpush.bf16.msra.mxu0 0
    %753 = vmatpush.bf16.msra.mxu0 0
    %754 = vmatpush.bf16.msra.mxu0 0
    %755 = vmatpush.bf16.msra.mxu0 0
    %756 = vmatpush.bf16.msra.mxu0 0
    %757 = vmatpush.bf16.msra.mxu0 %v746
    %758 = vmatpush.bf16.msra.mxu0 %v745
    %759 = vmatmul.bf16.gmra.mxu0 %v749
    %v760 = vpop.f32.mrf.mxu0
    %v761 = vadd.f32 0.0, %v760
    %v762 = vpop.f32.mrf.mxu0
    %v763 = vadd.f32 0.0, %v762
    %764 = vdwg.mxu0
    %765 = vst.msk [vmem:[#allocation8] sm:$0xff] %vm747, %v761
    %766 = vst.msk [vmem:[#allocation8 + $0x8] sm:$0xff] %vm747, %v763
    // Predicated region
    $region34: #{tpu_custom_call.1} parent=1 // pred_check
      _
    $region35: #{tpu_custom_call.1} parent=1 // pred_check_branch
      %768 = sbr.rel (0) target = $region37
    $region36: #{tpu_custom_call.1} parent=1 // pred_region
      %770 = vsyncadd [#allocation7], 0
      %s771 = sshll.u32 [#allocation8], 4
      %s772 = int_to_ptr.vmem [resolvable:$true] %s771
      %s773 = sshll.u32 %s8, 4
      %s774 = int_to_ptr.hbm [resolvable:$true] %s773
      %779 = dma.vmem_to_hbm [thread:$0]  %s772, 256, %s774, [#allocation7], 128, 128, 8
    $region37: #{tpu_custom_call.1} parent=1 // pred_fallthru
      _
    // Predicated region
    $region38: #{tpu_custom_call.1} parent=1 // pred_check
      _
    $region39: #{tpu_custom_call.1} parent=1 // pred_check_branch
      %781 = sbr.rel (0) target = $region41
    $region40: #{tpu_custom_call.1} parent=1 // pred_region
      %783 = dma.done [#allocation7], 256
    $region41: #{tpu_custom_call.1} parent=1 // pred_fallthru
      _
    %784 = vsyncpa [#allocation6], 1
    %785 = vsyncpa [#allocation7], 1

</llo_original>
